<compile_context>
chip_gen: v7x
topology: tpu7x:2x2x1
jax: 0.10.0
libtpu: 0.0.40
codegen_flags: <defaults>
</compile_context>

<pallas_src>
import jax
import jax.numpy as jnp
from jax.experimental import pallas as pl
from jax.experimental.pallas import tpu as pltpu


LANE = 128  # lane width (last dim) for dense stores / MXU columns


def _round_up(n, m):
    return ((n + m - 1) // m) * m


# ---------------------------------------------------------------------------
# Single fused kernel: image branch + two text branches sharing one weight set.
#   o1 = relu(x1 @ W1i + b1i) @ W2i + b2i
#   o2 = relu(x2 @ W1t + b1t) @ W2t + b2t
#   o3 = relu(x3 @ W1t + b1t) @ W2t + b2t
# Weights are bf16 (MXU-native), biases/accumulation/outputs are f32.
# ---------------------------------------------------------------------------
def _triplet_kernel(x1_ref, x2_ref, x3_ref,
                    w1i_ref, b1i_ref, w2i_ref, b2i_ref,
                    w1t_ref, b1t_ref, w2t_ref, b2t_ref,
                    o1_ref, o2_ref, o3_ref):
    f32 = jnp.float32
    bf16 = jnp.bfloat16

    # ---- image branch ----
    h1 = jnp.dot(x1_ref[...].astype(bf16), w1i_ref[...],
                 preferred_element_type=f32) + b1i_ref[...]
    h1 = jnp.maximum(h1, 0.0).astype(bf16)
    o1_ref[...] = (jnp.dot(h1, w2i_ref[...], preferred_element_type=f32)
                   + b2i_ref[...]).astype(o1_ref.dtype)

    # ---- text branch: W1t/W2t loaded into vregs once, reused for x2 and x3 ----
    w1t = w1t_ref[...]
    b1t = b1t_ref[...]
    w2t = w2t_ref[...]
    b2t = b2t_ref[...]

    h2 = jnp.maximum(
        jnp.dot(x2_ref[...].astype(bf16), w1t, preferred_element_type=f32) + b1t,
        0.0).astype(bf16)
    o2_ref[...] = (jnp.dot(h2, w2t, preferred_element_type=f32)
                   + b2t).astype(o2_ref.dtype)

    h3 = jnp.maximum(
        jnp.dot(x3_ref[...].astype(bf16), w1t, preferred_element_type=f32) + b1t,
        0.0).astype(bf16)
    o3_ref[...] = (jnp.dot(h3, w2t, preferred_element_type=f32)
                   + b2t).astype(o3_ref.dtype)


# ---------------------------------------------------------------------------
# Parameter init (deterministic) + lane-padding / bf16 cast of the weights.
# Zero pad lanes of W1/b1 give zero hidden activations (ReLU(0)=0) and zero
# pad rows of W2 contribute nothing, so the first `emb` lanes of the padded
# output equal the semantic output.
# ---------------------------------------------------------------------------
def init_mlp_params(key, d_in, d_hidden, d_out):
    k1, k2 = jax.random.split(key)
    w1 = jax.random.normal(k1, (d_in, d_hidden), jnp.float32) / jnp.sqrt(
        jnp.float32(d_in))
    b1 = jnp.zeros((1, d_hidden), jnp.float32)
    w2 = jax.random.normal(k2, (d_hidden, d_out), jnp.float32) / jnp.sqrt(
        jnp.float32(d_hidden))
    b2 = jnp.zeros((1, d_out), jnp.float32)
    return (w1, b1, w2, b2)


def pad_mlp_params(params, lane=LANE):
    """Lane-pad to 128 and cast weights to bf16; biases stay f32."""
    w1, b1, w2, b2 = params
    hid, emb = w2.shape
    hid_pad = _round_up(hid, lane)
    emb_pad = _round_up(emb, lane)
    w1p = jnp.pad(w1, ((0, 0), (0, hid_pad - hid))).astype(jnp.bfloat16)
    b1p = jnp.pad(b1, ((0, 0), (0, hid_pad - hid)))
    w2p = jnp.pad(w2, ((0, hid_pad - hid), (0, emb_pad - emb))).astype(jnp.bfloat16)
    b2p = jnp.pad(b2, ((0, 0), (0, emb_pad - emb)))
    return (w1p, b1p, w2p, b2p)


# ---------------------------------------------------------------------------
# TripletNetIm2Text forward — one pallas_call, no wrapper-side activation copies.
# ---------------------------------------------------------------------------
def triplet_net_im2text(x1, x2, x3, img_params_padded, txt_params_padded,
                        emb_dim):
    B = x1.shape[0]
    x1_flat = x1.reshape(B, -1)  # NCHW -> (B, C*H*W), free row-major reshape

    w1i, b1i, w2i, b2i = img_params_padded
    w1t, b1t, w2t, b2t = txt_params_padded
    hid_pad = w1i.shape[1]
    emb_pad = w2i.shape[1]
    d_img = x1_flat.shape[1]
    d_txt = x2.shape[1]

    operands = (x1_flat, x2, x3, w1i, b1i, w2i, b2i, w1t, b1t, w2t, b2t)

    flops = (2 * B * (d_img * hid_pad + hid_pad * emb_pad)
             + 2 * (2 * B) * (d_txt * hid_pad + hid_pad * emb_pad))
    in_bytes = sum(int(a.size) * a.dtype.itemsize for a in operands)
    out_bytes = 3 * B * emb_pad * 4
    bytes_accessed = in_bytes + out_bytes

    # Explicit VMEM limit sized from the resident buffers (with headroom)
    # instead of the 16/32/32 MiB scoped defaults.
    vmem_limit = int(min(32 * 1024 * 1024,
                         max(4 * 1024 * 1024, 2 * (in_bytes + out_bytes))))

    vmem_spec = pl.BlockSpec(memory_space=pltpu.MemorySpace.VMEM)
    out_sds = jax.ShapeDtypeStruct((B, emb_pad), jnp.float32)

    o1, o2, o3 = pl.pallas_call(
        _triplet_kernel,
        out_shape=(out_sds, out_sds, out_sds),
        in_specs=[vmem_spec] * len(operands),
        out_specs=(vmem_spec, vmem_spec, vmem_spec),
        compiler_params=pltpu.CompilerParams(vmem_limit_bytes=vmem_limit),
        cost_estimate=pl.CostEstimate(flops=flops, transcendentals=0,
                                      bytes_accessed=bytes_accessed),
    )(*operands)

    # Semantic embedding width (lane padding dropped outside the kernel).
    return o1[:, :emb_dim], o2[:, :emb_dim], o3[:, :emb_dim]


# ---------------------------------------------------------------------------
# Pure-JAX reference with identical quantization (bf16 weights/activations,
# f32 accumulate) so the tolerance can stay tight.
# ---------------------------------------------------------------------------
def _reference_mlp(x, padded_params, emb):
    w1, b1, w2, b2 = padded_params
    h = jnp.dot(x.astype(jnp.bfloat16), w1,
                preferred_element_type=jnp.float32) + b1
    h = jnp.maximum(h, 0.0).astype(jnp.bfloat16)
    y = jnp.dot(h, w2, preferred_element_type=jnp.float32) + b2
    return y[:, :emb]


if __name__ == "__main__":
    key = jax.random.PRNGKey(0)
    k_x1, k_x2, k_x3, k_img, k_txt = jax.random.split(key, 5)

    # Small shapes: image anchor (NCHW), two text samples (positive / negative).
    B, C, Hs, Ws = 2, 4, 16, 16
    D_TEXT = 64
    HID = 32
    EMB = 32

    x1 = jax.random.normal(k_x1, (B, C, Hs, Ws), jnp.float32)
    x2 = jax.random.normal(k_x2, (B, D_TEXT), jnp.float32)
    x3 = jax.random.normal(k_x3, (B, D_TEXT), jnp.float32)

    img_params_p = pad_mlp_params(init_mlp_params(k_img, C * Hs * Ws, HID, EMB))
    txt_params_p = pad_mlp_params(init_mlp_params(k_txt, D_TEXT, HID, EMB))

    out1, out2, out3 = triplet_net_im2text(
        x1, x2, x3, img_params_p, txt_params_p, EMB)
    jax.block_until_ready((out1, out2, out3))

    ref1 = _reference_mlp(x1.reshape(B, -1), img_params_p, EMB)
    ref2 = _reference_mlp(x2, txt_params_p, EMB)
    ref3 = _reference_mlp(x3, txt_params_p, EMB)

    assert out1.shape == (B, EMB) and out2.shape == (B, EMB) and out3.shape == (B, EMB)
    assert jnp.allclose(out1, ref1, rtol=1e-3, atol=1e-3)
    assert jnp.allclose(out2, ref2, rtol=1e-3, atol=1e-3)
    assert jnp.allclose(out3, ref3, rtol=1e-3, atol=1e-3)

    print("KERNEL_OK")
</pallas_src>

<mosaic_0001>
module attributes {stable_mosaic.version = 11 : i64} {
  func.func @_triplet_kernel(%arg0: memref<2x1024xf32, #tpu.memory_space<vmem>>, %arg1: memref<2x64xf32, #tpu.memory_space<vmem>>, %arg2: memref<2x64xf32, #tpu.memory_space<vmem>>, %arg3: memref<1024x128xbf16, #tpu.memory_space<vmem>>, %arg4: memref<1x128xf32, #tpu.memory_space<vmem>>, %arg5: memref<128x128xbf16, #tpu.memory_space<vmem>>, %arg6: memref<1x128xf32, #tpu.memory_space<vmem>>, %arg7: memref<64x128xbf16, #tpu.memory_space<vmem>>, %arg8: memref<1x128xf32, #tpu.memory_space<vmem>>, %arg9: memref<128x128xbf16, #tpu.memory_space<vmem>>, %arg10: memref<1x128xf32, #tpu.memory_space<vmem>>, %arg11: memref<2x128xf32, #tpu.memory_space<vmem>>, %arg12: memref<2x128xf32, #tpu.memory_space<vmem>>, %arg13: memref<2x128xf32, #tpu.memory_space<vmem>>) attributes {dimension_semantics = [], scalar_prefetch = 0 : i64, scratch_operands = 0 : i64, tpu.core_type = #tpu.core_type<tc>} {
    %c0 = arith.constant 0 : index
    %c0_0 = arith.constant 0 : index
    %0 = vector.load %arg0[%c0, %c0_0] : memref<2x1024xf32, #tpu.memory_space<vmem>>, vector<2x1024xf32>
    %1 = arith.truncf %0 : vector<2x1024xf32> to vector<2x1024xbf16>
    %c0_1 = arith.constant 0 : index
    %c0_2 = arith.constant 0 : index
    %2 = vector.load %arg3[%c0_1, %c0_2] : memref<1024x128xbf16, #tpu.memory_space<vmem>>, vector<1024x128xbf16>
    %cst = arith.constant dense<0.000000e+00> : vector<2x128xf32>
    %3 = tpu.matmul %1, %2, %cst {dimension_numbers = #tpu.dot_dimension_numbers<[1], [0], [0], [1], [0, 0, 1, 1], [], []>} : vector<2x1024xbf16>, vector<1024x128xbf16>, vector<2x128xf32> -> vector<2x128xf32>
    %c0_3 = arith.constant 0 : index
    %c0_4 = arith.constant 0 : index
    %4 = vector.load %arg4[%c0_3, %c0_4] : memref<1x128xf32, #tpu.memory_space<vmem>>, vector<1x128xf32>
    %5 = vector.broadcast %4 : vector<1x128xf32> to vector<2x128xf32>
    %6 = arith.addf %3, %5 : vector<2x128xf32>
    %cst_5 = arith.constant 0.000000e+00 : f32
    %7 = vector.broadcast %cst_5 : f32 to vector<2x128xf32>
    %8 = arith.maximumf %6, %7 : vector<2x128xf32>
    %9 = arith.truncf %8 : vector<2x128xf32> to vector<2x128xbf16>
    %c0_6 = arith.constant 0 : index
    %c0_7 = arith.constant 0 : index
    %10 = vector.load %arg5[%c0_6, %c0_7] : memref<128x128xbf16, #tpu.memory_space<vmem>>, vector<128x128xbf16>
    %cst_8 = arith.constant dense<0.000000e+00> : vector<2x128xf32>
    %11 = tpu.matmul %9, %10, %cst_8 {dimension_numbers = #tpu.dot_dimension_numbers<[1], [0], [0], [1], [0, 0, 1, 1], [], []>} : vector<2x128xbf16>, vector<128x128xbf16>, vector<2x128xf32> -> vector<2x128xf32>
    %c0_9 = arith.constant 0 : index
    %c0_10 = arith.constant 0 : index
    %12 = vector.load %arg6[%c0_9, %c0_10] : memref<1x128xf32, #tpu.memory_space<vmem>>, vector<1x128xf32>
    %13 = vector.broadcast %12 : vector<1x128xf32> to vector<2x128xf32>
    %14 = arith.addf %11, %13 : vector<2x128xf32>
    %c0_11 = arith.constant 0 : index
    %c0_12 = arith.constant 0 : index
    %15 = vector.load %arg11[%c0_11, %c0_12] : memref<2x128xf32, #tpu.memory_space<vmem>>, vector<2x128xf32>
    tpu.vector_store %arg11[%c0_11, %c0_12], %14 {strides = array<i32>} : memref<2x128xf32, #tpu.memory_space<vmem>>, vector<2x128xf32>,
    %c0_13 = arith.constant 0 : index
    %c0_14 = arith.constant 0 : index
    %16 = vector.load %arg7[%c0_13, %c0_14] : memref<64x128xbf16, #tpu.memory_space<vmem>>, vector<64x128xbf16>
    %c0_15 = arith.constant 0 : index
    %c0_16 = arith.constant 0 : index
    %17 = vector.load %arg8[%c0_15, %c0_16] : memref<1x128xf32, #tpu.memory_space<vmem>>, vector<1x128xf32>
    %c0_17 = arith.constant 0 : index
    %c0_18 = arith.constant 0 : index
    %18 = vector.load %arg9[%c0_17, %c0_18] : memref<128x128xbf16, #tpu.memory_space<vmem>>, vector<128x128xbf16>
    %c0_19 = arith.constant 0 : index
    %c0_20 = arith.constant 0 : index
    %19 = vector.load %arg10[%c0_19, %c0_20] : memref<1x128xf32, #tpu.memory_space<vmem>>, vector<1x128xf32>
    %c0_21 = arith.constant 0 : index
    %c0_22 = arith.constant 0 : index
    %20 = vector.load %arg1[%c0_21, %c0_22] : memref<2x64xf32, #tpu.memory_space<vmem>>, vector<2x64xf32>
    %21 = arith.truncf %20 : vector<2x64xf32> to vector<2x64xbf16>
    %cst_23 = arith.constant dense<0.000000e+00> : vector<2x128xf32>
    %22 = tpu.matmul %21, %16, %cst_23 {dimension_numbers = #tpu.dot_dimension_numbers<[1], [0], [0], [1], [0, 0, 1, 1], [], []>} : vector<2x64xbf16>, vector<64x128xbf16>, vector<2x128xf32> -> vector<2x128xf32>
    %23 = vector.broadcast %17 : vector<1x128xf32> to vector<2x128xf32>
    %24 = arith.addf %22, %23 : vector<2x128xf32>
    %cst_24 = arith.constant 0.000000e+00 : f32
    %25 = vector.broadcast %cst_24 : f32 to vector<2x128xf32>
    %26 = arith.maximumf %24, %25 : vector<2x128xf32>
    %27 = arith.truncf %26 : vector<2x128xf32> to vector<2x128xbf16>
    %cst_25 = arith.constant dense<0.000000e+00> : vector<2x128xf32>
    %28 = tpu.matmul %27, %18, %cst_25 {dimension_numbers = #tpu.dot_dimension_numbers<[1], [0], [0], [1], [0, 0, 1, 1], [], []>} : vector<2x128xbf16>, vector<128x128xbf16>, vector<2x128xf32> -> vector<2x128xf32>
    %29 = vector.broadcast %19 : vector<1x128xf32> to vector<2x128xf32>
    %30 = arith.addf %28, %29 : vector<2x128xf32>
    %c0_26 = arith.constant 0 : index
    %c0_27 = arith.constant 0 : index
    %31 = vector.load %arg12[%c0_26, %c0_27] : memref<2x128xf32, #tpu.memory_space<vmem>>, vector<2x128xf32>
    tpu.vector_store %arg12[%c0_26, %c0_27], %30 {strides = array<i32>} : memref<2x128xf32, #tpu.memory_space<vmem>>, vector<2x128xf32>,
    %c0_28 = arith.constant 0 : index
    %c0_29 = arith.constant 0 : index
    %32 = vector.load %arg2[%c0_28, %c0_29] : memref<2x64xf32, #tpu.memory_space<vmem>>, vector<2x64xf32>
    %33 = arith.truncf %32 : vector<2x64xf32> to vector<2x64xbf16>
    %cst_30 = arith.constant dense<0.000000e+00> : vector<2x128xf32>
    %34 = tpu.matmul %33, %16, %cst_30 {dimension_numbers = #tpu.dot_dimension_numbers<[1], [0], [0], [1], [0, 0, 1, 1], [], []>} : vector<2x64xbf16>, vector<64x128xbf16>, vector<2x128xf32> -> vector<2x128xf32>
    %35 = vector.broadcast %17 : vector<1x128xf32> to vector<2x128xf32>
    %36 = arith.addf %34, %35 : vector<2x128xf32>
    %cst_31 = arith.constant 0.000000e+00 : f32
    %37 = vector.broadcast %cst_31 : f32 to vector<2x128xf32>
    %38 = arith.maximumf %36, %37 : vector<2x128xf32>
    %39 = arith.truncf %38 : vector<2x128xf32> to vector<2x128xbf16>
    %cst_32 = arith.constant dense<0.000000e+00> : vector<2x128xf32>
    %40 = tpu.matmul %39, %18, %cst_32 {dimension_numbers = #tpu.dot_dimension_numbers<[1], [0], [0], [1], [0, 0, 1, 1], [], []>} : vector<2x128xbf16>, vector<128x128xbf16>, vector<2x128xf32> -> vector<2x128xf32>
    %41 = vector.broadcast %19 : vector<1x128xf32> to vector<2x128xf32>
    %42 = arith.addf %40, %41 : vector<2x128xf32>
    %c0_33 = arith.constant 0 : index
    %c0_34 = arith.constant 0 : index
    %43 = vector.load %arg13[%c0_33, %c0_34] : memref<2x128xf32, #tpu.memory_space<vmem>>, vector<2x128xf32>
    tpu.vector_store %arg13[%c0_33, %c0_34], %42 {strides = array<i32>} : memref<2x128xf32, #tpu.memory_space<vmem>>, vector<2x128xf32>,
    return
  }
}

</mosaic_0001>

<llo_original>
// kernel: tpu_custom_call.1
$region0: #{tpu_custom_call.1}
  #allocation0 [shape = 'u32[]', space=smem, size = 0x4, offset = 0x4, fixed_abs, tag = 'smem constant byte address 0x4 - core index']
  #allocation1 [shape = 'u32[144,128]{1,0:T(1,128)}', space=vmem, size = 0x12000, scoped, tag = 'internal scratch']
  %s0 = inlined_call_operand.hbm [shape: f32[2,1024], index: 0, kind: input, shape index: {}]
  %s1 = inlined_call_operand.vmem [shape: f32[2,64], index: 1, kind: input, shape index: {}]
  %s2 = inlined_call_operand.vmem [shape: f32[2,64], index: 2, kind: input, shape index: {}]
  %s3 = inlined_call_operand.hbm [shape: bf16[1024,128], index: 3, kind: input, shape index: {}]
  %s4 = inlined_call_operand.vmem [shape: f32[1,128], index: 4, kind: input, shape index: {}]
  %s5 = inlined_call_operand.hbm [shape: bf16[128,128], index: 5, kind: input, shape index: {}]
  %s6 = inlined_call_operand.vmem [shape: f32[1,128], index: 6, kind: input, shape index: {}]
  %s7 = inlined_call_operand.hbm [shape: bf16[64,128], index: 7, kind: input, shape index: {}]
  %s8 = inlined_call_operand.vmem [shape: f32[1,128], index: 8, kind: input, shape index: {}]
  %s9 = inlined_call_operand.hbm [shape: bf16[128,128], index: 9, kind: input, shape index: {}]
  %s10 = inlined_call_operand.vmem [shape: f32[1,128], index: 10, kind: input, shape index: {}]
  %s11 = inlined_call_operand.hbm [shape: f32[2,128], index: 11, kind: output, shape index: {0}]
  %s12 = inlined_call_operand.hbm [shape: f32[2,128], index: 12, kind: output, shape index: {1}]
  %s13 = inlined_call_operand.hbm [shape: f32[2,128], index: 13, kind: output, shape index: {2}]
  %14 = xla_tuple %s11, %s12, %s13
  %s15 = sld [smem:[#allocation0]]
  $region90: #{tpu_custom_call.1} parent=0
    _
  %s17 = ssub.s32 1, %s15
  %s18 = scalar_select 0, %s17, %s15
  $region1: #{tpu_custom_call.1} parent=0
    #allocation2 [shape = 'u8[8192]{0}', space=vmem, size = 0x2000, scoped, tag = 'input window, operand 0, single buffered']
    #allocation3 [shape = 's32[1]{0}', space=sflag, size = 0x4, scoped, tag = 'scoped memory for tpu_custom_call.1']
    #allocation4 [shape = 's32[1]{0}', space=sflag, size = 0x4, scoped, tag = 'scoped memory for tpu_custom_call.1']
    #allocation5 [shape = 'u8[262144]{0}', space=vmem, size = 0x40000, scoped, tag = 'input window, operand 3, single buffered']
    #allocation6 [shape = 's32[1]{0}', space=sflag, size = 0x4, scoped, tag = 'scoped memory for tpu_custom_call.1']
    #allocation7 [shape = 'u8[32768]{0}', space=vmem, size = 0x8000, scoped, tag = 'input window, operand 5, single buffered']
    #allocation8 [shape = 'u8[16384]{0}', space=vmem, size = 0x4000, scoped, tag = 'input window, operand 7, single buffered']
    #allocation9 [shape = 's32[1]{0}', space=sflag, size = 0x4, scoped, tag = 'scoped memory for tpu_custom_call.1']
    #allocation10 [shape = 'u8[32768]{0}', space=vmem, size = 0x8000, scoped, tag = 'input window, operand 9, single buffered']
    #allocation11 [shape = 'u8[1024]{0}', space=vmem, size = 0x400, scoped, tag = 'output window, operand 0, single buffered']
    #allocation12 [shape = 'u8[1024]{0}', space=vmem, size = 0x400, scoped, tag = 'output window, operand 1, single buffered']
    #allocation13 [shape = 's32[1]{0}', space=sflag, size = 0x4, scoped, tag = 'scoped memory for tpu_custom_call.1']
    #allocation14 [shape = 'u8[1024]{0}', space=vmem, size = 0x400, scoped, tag = 'output window, operand 2, single buffered']
    %19 = vsyncpa [#allocation3], 0
    %20 = vsyncpa [#allocation6], 0
    %21 = vsyncpa [#allocation9], 0
    %22 = vsyncpa [#allocation4], 0
    %23 = vsyncpa [#allocation13], 0
    // Predicated region
    $region2: #{tpu_custom_call.1} parent=1 // pred_check
      _
    $region3: #{tpu_custom_call.1} parent=1 // pred_check_branch
      %25 = sbr.rel (0) target = $region5
    $region4: #{tpu_custom_call.1} parent=1 // pred_region
      %s27 = ssub.s32 256, 256
      %28 = vsyncadd [#allocation3], %s27
      %s30 = sshll.u32 [#allocation2], 4
      %s31 = int_to_ptr.vmem [resolvable:$true] %s30
      %33 = dma.hbm_to_vmem [thread:$0]  %s0, 256, %s31, [#allocation3]
    $region5: #{tpu_custom_call.1} parent=1 // pred_fallthru
      _
    // Predicated region
    $region6: #{tpu_custom_call.1} parent=1 // pred_check
      _
    $region7: #{tpu_custom_call.1} parent=1 // pred_check_branch
      %35 = sbr.rel (0) target = $region9
    $region8: #{tpu_custom_call.1} parent=1 // pred_region
      _
    $region9: #{tpu_custom_call.1} parent=1 // pred_fallthru
      _
    // Predicated region
    $region10: #{tpu_custom_call.1} parent=1 // pred_check
      _
    $region11: #{tpu_custom_call.1} parent=1 // pred_check_branch
      %37 = sbr.rel (0) target = $region13
    $region12: #{tpu_custom_call.1} parent=1 // pred_region
      _
    $region13: #{tpu_custom_call.1} parent=1 // pred_fallthru
      _
    // Predicated region
    $region14: #{tpu_custom_call.1} parent=1 // pred_check
      _
    $region15: #{tpu_custom_call.1} parent=1 // pred_check_branch
      %39 = sbr.rel (0) target = $region17
    $region16: #{tpu_custom_call.1} parent=1 // pred_region
      %s41 = ssub.s32 8192, 8192
      %42 = vsyncadd [#allocation6], %s41
      %s43 = sshll.u32 [#allocation5], 4
      %s44 = int_to_ptr.vmem [resolvable:$true] %s43
      %49 = dma.hbm_to_vmem [thread:$0]  %s3, 8192, %s44, [#allocation6], 64, 64, 4
    $region17: #{tpu_custom_call.1} parent=1 // pred_fallthru
      _
    // Predicated region
    $region18: #{tpu_custom_call.1} parent=1 // pred_check
      _
    $region19: #{tpu_custom_call.1} parent=1 // pred_check_branch
      %51 = sbr.rel (0) target = $region21
    $region20: #{tpu_custom_call.1} parent=1 // pred_region
      _
    $region21: #{tpu_custom_call.1} parent=1 // pred_fallthru
      _
    // Predicated region
    $region22: #{tpu_custom_call.1} parent=1 // pred_check
      _
    $region23: #{tpu_custom_call.1} parent=1 // pred_check_branch
      %53 = sbr.rel (0) target = $region25
    $region24: #{tpu_custom_call.1} parent=1 // pred_region
      %s55 = ssub.s32 1024, 1024
      %56 = vsyncadd [#allocation6], %s55
      %s57 = sshll.u32 [#allocation7], 4
      %s58 = int_to_ptr.vmem [resolvable:$true] %s57
      %63 = dma.hbm_to_vmem [thread:$0]  %s5, 1024, %s58, [#allocation6], 64, 64, 4
    $region25: #{tpu_custom_call.1} parent=1 // pred_fallthru
      _
    // Predicated region
    $region26: #{tpu_custom_call.1} parent=1 // pred_check
      _
    $region27: #{tpu_custom_call.1} parent=1 // pred_check_branch
      %65 = sbr.rel (0) target = $region29
    $region28: #{tpu_custom_call.1} parent=1 // pred_region
      _
    $region29: #{tpu_custom_call.1} parent=1 // pred_fallthru
      _
    // Predicated region
    $region30: #{tpu_custom_call.1} parent=1 // pred_check
      _
    $region31: #{tpu_custom_call.1} parent=1 // pred_check_branch
      %67 = sbr.rel (0) target = $region33
    $region32: #{tpu_custom_call.1} parent=1 // pred_region
      %s69 = ssub.s32 512, 512
      %70 = vsyncadd [#allocation9], %s69
      %s71 = sshll.u32 [#allocation8], 4
      %s72 = int_to_ptr.vmem [resolvable:$true] %s71
      %77 = dma.hbm_to_vmem [thread:$0]  %s7, 512, %s72, [#allocation9], 64, 64, 4
    $region33: #{tpu_custom_call.1} parent=1 // pred_fallthru
      _
    // Predicated region
    $region34: #{tpu_custom_call.1} parent=1 // pred_check
      _
    $region35: #{tpu_custom_call.1} parent=1 // pred_check_branch
      %79 = sbr.rel (0) target = $region37
    $region36: #{tpu_custom_call.1} parent=1 // pred_region
      _
    $region37: #{tpu_custom_call.1} parent=1 // pred_fallthru
      _
    // Predicated region
    $region38: #{tpu_custom_call.1} parent=1 // pred_check
      _
    $region39: #{tpu_custom_call.1} parent=1 // pred_check_branch
      %81 = sbr.rel (0) target = $region41
    $region40: #{tpu_custom_call.1} parent=1 // pred_region
      %s83 = ssub.s32 1024, 1024
      %84 = vsyncadd [#allocation9], %s83
      %s85 = sshll.u32 [#allocation10], 4
      %s86 = int_to_ptr.vmem [resolvable:$true] %s85
      %91 = dma.hbm_to_vmem [thread:$0]  %s9, 1024, %s86, [#allocation9], 64, 64, 4
    $region41: #{tpu_custom_call.1} parent=1 // pred_fallthru
      _
    // Predicated region
    $region42: #{tpu_custom_call.1} parent=1 // pred_check
      _
    $region43: #{tpu_custom_call.1} parent=1 // pred_check_branch
      %93 = sbr.rel (0) target = $region45
    $region44: #{tpu_custom_call.1} parent=1 // pred_region
      _
    $region45: #{tpu_custom_call.1} parent=1 // pred_fallthru
      _
    // Predicated region
    $region46: #{tpu_custom_call.1} parent=1 // pred_check
      _
    $region47: #{tpu_custom_call.1} parent=1 // pred_check_branch
      %95 = sbr.rel (0) target = $region49
    $region48: #{tpu_custom_call.1} parent=1 // pred_region
      %96 = dma.done [#allocation3], 256
    $region49: #{tpu_custom_call.1} parent=1 // pred_fallthru
      _
    // Predicated region
    $region50: #{tpu_custom_call.1} parent=1 // pred_check
      _
    $region51: #{tpu_custom_call.1} parent=1 // pred_check_branch
      %98 = sbr.rel (0) target = $region53
    $region52: #{tpu_custom_call.1} parent=1 // pred_region
      %99 = dma.done [#allocation6], 8192
    $region53: #{tpu_custom_call.1} parent=1 // pred_fallthru
      _
    // Predicated region
    $region54: #{tpu_custom_call.1} parent=1 // pred_check
      _
    $region55: #{tpu_custom_call.1} parent=1 // pred_check_branch
      %101 = sbr.rel (0) target = $region57
    $region56: #{tpu_custom_call.1} parent=1 // pred_region
      %102 = dma.done [#allocation6], 1024
    $region57: #{tpu_custom_call.1} parent=1 // pred_fallthru
      _
    // Predicated region
    $region58: #{tpu_custom_call.1} parent=1 // pred_check
      _
    $region59: #{tpu_custom_call.1} parent=1 // pred_check_branch
      %104 = sbr.rel (0) target = $region61
    $region60: #{tpu_custom_call.1} parent=1 // pred_region
      %105 = dma.done [#allocation9], 512
    $region61: #{tpu_custom_call.1} parent=1 // pred_fallthru
      _
    // Predicated region
    $region62: #{tpu_custom_call.1} parent=1 // pred_check
      _
    $region63: #{tpu_custom_call.1} parent=1 // pred_check_branch
      %107 = sbr.rel (0) target = $region65
    $region64: #{tpu_custom_call.1} parent=1 // pred_region
      %108 = dma.done [#allocation9], 1024
    $region65: #{tpu_custom_call.1} parent=1 // pred_fallthru
      _
    %v110 = vld [vmem:[#allocation2] sm:$0xff]
    %v111 = vld [vmem:[#allocation2 + $0x8] sm:$0xff]
    %v114 = vcombine.high %v110, %v110
    %v116 = vunpack.c.l.s4 1983009808
    %v117 = vunpack.c.0.s8 %v116
    %v118 = vlaneseq
    %v119 = vshrl.u32 %v118, 7
    %v120 = vsub.s32 %v117, %v119
    %v121 = vrot.slane %v110, %v120
    %v123 = vunpack.c.l.s4 1983009808
    %v124 = vunpack.c.0.s8 %v123
    %v125 = vlaneseq
    %v126 = vshrl.u32 %v125, 7
    %v127 = vsub.s32 %v124, %v126
    %v128 = vrot.slane %v114, %v127
    %v129 = vcombine.high %v121, %v121
    %v130 = vcombine.high %v128, %v128
    %v131 = vcombine.high %v111, %v111
    %v133 = vunpack.c.l.s4 1983009808
    %v134 = vunpack.c.0.s8 %v133
    %v135 = vlaneseq
    %v136 = vshrl.u32 %v135, 7
    %v137 = vsub.s32 %v134, %v136
    %v138 = vrot.slane %v111, %v137
    %v140 = vunpack.c.l.s4 1983009808
    %v141 = vunpack.c.0.s8 %v140
    %v142 = vlaneseq
    %v143 = vshrl.u32 %v142, 7
    %v144 = vsub.s32 %v141, %v143
    %v145 = vrot.slane %v131, %v144
    %v146 = vcombine.high %v138, %v138
    %v147 = vcombine.high %v145, %v145
    %v156 = vpack.c.bf16 %v121, %v121
    %v157 = vpack.c.bf16 %v129, %v129
    %v158 = vpack.c.bf16 %v128, %v128
    %v159 = vpack.c.bf16 %v130, %v130
    %v160 = vpack.c.bf16 %v138, %v138
    %v161 = vpack.c.bf16 %v146, %v146
    %v162 = vpack.c.bf16 %v145, %v145
    %v163 = vpack.c.bf16 %v147, %v147
    %v164 = vld [vmem:[#allocation5] sm:$0xf]
    %v165 = vld [vmem:[#allocation5 + $0x4] sm:$0xf]
    %v166 = vld [vmem:[#allocation5 + $0x8] sm:$0xf]
    %v167 = vld [vmem:[#allocation5 + $0xc] sm:$0xf]
    %v168 = vld [vmem:[#allocation5 + $0x10] sm:$0xf]
    %v169 = vld [vmem:[#allocation5 + $0x14] sm:$0xf]
    %v170 = vld [vmem:[#allocation5 + $0x18] sm:$0xf]
    %v171 = vld [vmem:[#allocation5 + $0x1c] sm:$0xf]
    %v172 = vld [vmem:[#allocation5 + $0x20] sm:$0xf]
    %v173 = vld [vmem:[#allocation5 + $0x24] sm:$0xf]
    %v174 = vld [vmem:[#allocation5 + $0x28] sm:$0xf]
    %v175 = vld [vmem:[#allocation5 + $0x2c] sm:$0xf]
    %v176 = vld [vmem:[#allocation5 + $0x30] sm:$0xf]
    %v177 = vld [vmem:[#allocation5 + $0x34] sm:$0xf]
    %v178 = vld [vmem:[#allocation5 + $0x38] sm:$0xf]
    %v179 = vld [vmem:[#allocation5 + $0x3c] sm:$0xf]
    %v180 = vld [vmem:[#allocation5 + $0x40] sm:$0xf]
    %v181 = vld [vmem:[#allocation5 + $0x44] sm:$0xf]
    %v182 = vld [vmem:[#allocation5 + $0x48] sm:$0xf]
    %v183 = vld [vmem:[#allocation5 + $0x4c] sm:$0xf]
    %v184 = vld [vmem:[#allocation5 + $0x50] sm:$0xf]
    %v185 = vld [vmem:[#allocation5 + $0x54] sm:$0xf]
    %v186 = vld [vmem:[#allocation5 + $0x58] sm:$0xf]
    %v187 = vld [vmem:[#allocation5 + $0x5c] sm:$0xf]
    %v188 = vld [vmem:[#allocation5 + $0x60] sm:$0xf]
    %v189 = vld [vmem:[#allocation5 + $0x64] sm:$0xf]
    %v190 = vld [vmem:[#allocation5 + $0x68] sm:$0xf]
    %v191 = vld [vmem:[#allocation5 + $0x6c] sm:$0xf]
    %v192 = vld [vmem:[#allocation5 + $0x70] sm:$0xf]
    %v193 = vld [vmem:[#allocation5 + $0x74] sm:$0xf]
    %v194 = vld [vmem:[#allocation5 + $0x78] sm:$0xf]
    %v195 = vld [vmem:[#allocation5 + $0x7c] sm:$0xf]
    %v196 = vld [vmem:[#allocation5 + $0x80] sm:$0xf]
    %v197 = vld [vmem:[#allocation5 + $0x84] sm:$0xf]
    %v198 = vld [vmem:[#allocation5 + $0x88] sm:$0xf]
    %v199 = vld [vmem:[#allocation5 + $0x8c] sm:$0xf]
    %v200 = vld [vmem:[#allocation5 + $0x90] sm:$0xf]
    %v201 = vld [vmem:[#allocation5 + $0x94] sm:$0xf]
    %v202 = vld [vmem:[#allocation5 + $0x98] sm:$0xf]
    %v203 = vld [vmem:[#allocation5 + $0x9c] sm:$0xf]
    %v204 = vld [vmem:[#allocation5 + $0xa0] sm:$0xf]
    %v205 = vld [vmem:[#allocation5 + $0xa4] sm:$0xf]
    %v206 = vld [vmem:[#allocation5 + $0xa8] sm:$0xf]
    %v207 = vld [vmem:[#allocation5 + $0xac] sm:$0xf]
    %v208 = vld [vmem:[#allocation5 + $0xb0] sm:$0xf]
    %v209 = vld [vmem:[#allocation5 + $0xb4] sm:$0xf]
    %v210 = vld [vmem:[#allocation5 + $0xb8] sm:$0xf]
    %v211 = vld [vmem:[#allocation5 + $0xbc] sm:$0xf]
    %v212 = vld [vmem:[#allocation5 + $0xc0] sm:$0xf]
    %v213 = vld [vmem:[#allocation5 + $0xc4] sm:$0xf]
    %v214 = vld [vmem:[#allocation5 + $0xc8] sm:$0xf]
    %v215 = vld [vmem:[#allocation5 + $0xcc] sm:$0xf]
    %v216 = vld [vmem:[#allocation5 + $0xd0] sm:$0xf]
    %v217 = vld [vmem:[#allocation5 + $0xd4] sm:$0xf]
    %v218 = vld [vmem:[#allocation5 + $0xd8] sm:$0xf]
    %v219 = vld [vmem:[#allocation5 + $0xdc] sm:$0xf]
    %v220 = vld [vmem:[#allocation5 + $0xe0] sm:$0xf]
    %v221 = vld [vmem:[#allocation5 + $0xe4] sm:$0xf]
    %v222 = vld [vmem:[#allocation5 + $0xe8] sm:$0xf]
    %v223 = vld [vmem:[#allocation5 + $0xec] sm:$0xf]
    %v224 = vld [vmem:[#allocation5 + $0xf0] sm:$0xf]
    %v225 = vld [vmem:[#allocation5 + $0xf4] sm:$0xf]
    %v226 = vld [vmem:[#allocation5 + $0xf8] sm:$0xf]
    %v227 = vld [vmem:[#allocation5 + $0xfc] sm:$0xf]
    %v228 = vld [vmem:[#allocation5 + $0x100] sm:$0xf]
    %v229 = vld [vmem:[#allocation5 + $0x104] sm:$0xf]
    %v230 = vld [vmem:[#allocation5 + $0x108] sm:$0xf]
    %v231 = vld [vmem:[#allocation5 + $0x10c] sm:$0xf]
    %v232 = vld [vmem:[#allocation5 + $0x110] sm:$0xf]
    %v233 = vld [vmem:[#allocation5 + $0x114] sm:$0xf]
    %v234 = vld [vmem:[#allocation5 + $0x118] sm:$0xf]
    %v235 = vld [vmem:[#allocation5 + $0x11c] sm:$0xf]
    %v236 = vld [vmem:[#allocation5 + $0x120] sm:$0xf]
    %v237 = vld [vmem:[#allocation5 + $0x124] sm:$0xf]
    %v238 = vld [vmem:[#allocation5 + $0x128] sm:$0xf]
    %v239 = vld [vmem:[#allocation5 + $0x12c] sm:$0xf]
    %v240 = vld [vmem:[#allocation5 + $0x130] sm:$0xf]
    %v241 = vld [vmem:[#allocation5 + $0x134] sm:$0xf]
    %v242 = vld [vmem:[#allocation5 + $0x138] sm:$0xf]
    %v243 = vld [vmem:[#allocation5 + $0x13c] sm:$0xf]
    %v244 = vld [vmem:[#allocation5 + $0x140] sm:$0xf]
    %v245 = vld [vmem:[#allocation5 + $0x144] sm:$0xf]
    %v246 = vld [vmem:[#allocation5 + $0x148] sm:$0xf]
    %v247 = vld [vmem:[#allocation5 + $0x14c] sm:$0xf]
    %v248 = vld [vmem:[#allocation5 + $0x150] sm:$0xf]
    %v249 = vld [vmem:[#allocation5 + $0x154] sm:$0xf]
    %v250 = vld [vmem:[#allocation5 + $0x158] sm:$0xf]
    %v251 = vld [vmem:[#allocation5 + $0x15c] sm:$0xf]
    %v252 = vld [vmem:[#allocation5 + $0x160] sm:$0xf]
    %v253 = vld [vmem:[#allocation5 + $0x164] sm:$0xf]
    %v254 = vld [vmem:[#allocation5 + $0x168] sm:$0xf]
    %v255 = vld [vmem:[#allocation5 + $0x16c] sm:$0xf]
    %v256 = vld [vmem:[#allocation5 + $0x170] sm:$0xf]
    %v257 = vld [vmem:[#allocation5 + $0x174] sm:$0xf]
    %v258 = vld [vmem:[#allocation5 + $0x178] sm:$0xf]
    %v259 = vld [vmem:[#allocation5 + $0x17c] sm:$0xf]
    %v260 = vld [vmem:[#allocation5 + $0x180] sm:$0xf]
    %v261 = vld [vmem:[#allocation5 + $0x184] sm:$0xf]
    %v262 = vld [vmem:[#allocation5 + $0x188] sm:$0xf]
    %v263 = vld [vmem:[#allocation5 + $0x18c] sm:$0xf]
    %v264 = vld [vmem:[#allocation5 + $0x190] sm:$0xf]
    %v265 = vld [vmem:[#allocation5 + $0x194] sm:$0xf]
    %v266 = vld [vmem:[#allocation5 + $0x198] sm:$0xf]
    %v267 = vld [vmem:[#allocation5 + $0x19c] sm:$0xf]
    %v268 = vld [vmem:[#allocation5 + $0x1a0] sm:$0xf]
    %v269 = vld [vmem:[#allocation5 + $0x1a4] sm:$0xf]
    %v270 = vld [vmem:[#allocation5 + $0x1a8] sm:$0xf]
    %v271 = vld [vmem:[#allocation5 + $0x1ac] sm:$0xf]
    %v272 = vld [vmem:[#allocation5 + $0x1b0] sm:$0xf]
    %v273 = vld [vmem:[#allocation5 + $0x1b4] sm:$0xf]
    %v274 = vld [vmem:[#allocation5 + $0x1b8] sm:$0xf]
    %v275 = vld [vmem:[#allocation5 + $0x1bc] sm:$0xf]
    %v276 = vld [vmem:[#allocation5 + $0x1c0] sm:$0xf]
    %v277 = vld [vmem:[#allocation5 + $0x1c4] sm:$0xf]
    %v278 = vld [vmem:[#allocation5 + $0x1c8] sm:$0xf]
    %v279 = vld [vmem:[#allocation5 + $0x1cc] sm:$0xf]
    %v280 = vld [vmem:[#allocation5 + $0x1d0] sm:$0xf]
    %v281 = vld [vmem:[#allocation5 + $0x1d4] sm:$0xf]
    %v282 = vld [vmem:[#allocation5 + $0x1d8] sm:$0xf]
    %v283 = vld [vmem:[#allocation5 + $0x1dc] sm:$0xf]
    %v284 = vld [vmem:[#allocation5 + $0x1e0] sm:$0xf]
    %v285 = vld [vmem:[#allocation5 + $0x1e4] sm:$0xf]
    %v286 = vld [vmem:[#allocation5 + $0x1e8] sm:$0xf]
    %v287 = vld [vmem:[#allocation5 + $0x1ec] sm:$0xf]
    %v288 = vld [vmem:[#allocation5 + $0x1f0] sm:$0xf]
    %v289 = vld [vmem:[#allocation5 + $0x1f4] sm:$0xf]
    %v290 = vld [vmem:[#allocation5 + $0x1f8] sm:$0xf]
    %v291 = vld [vmem:[#allocation5 + $0x1fc] sm:$0xf]
    %v292 = vld [vmem:[%s4] sm:$0x1]
    %v294 = vlaneseq
    %v295 = vshrl.u32 %v294, 7
    %v296 = vsub.s32 0, %v295
    %v297 = vrot.slane %v292, %v296
    %v427 = vunpack.c.l.b16 %v164
    %v428 = vunpack.c.l.b16 %v165
    %v429 = vunpack.c.l.b16 %v166
    %v430 = vunpack.c.l.b16 %v167
    %v431 = vunpack.c.l.b16 %v168
    %v432 = vunpack.c.l.b16 %v169
    %v433 = vunpack.c.l.b16 %v170
    %v434 = vunpack.c.l.b16 %v171
    %v435 = vunpack.c.l.b16 %v172
    %v436 = vunpack.c.l.b16 %v173
    %v437 = vunpack.c.l.b16 %v174
    %v438 = vunpack.c.l.b16 %v175
    %v439 = vunpack.c.l.b16 %v176
    %v440 = vunpack.c.l.b16 %v177
    %v441 = vunpack.c.l.b16 %v178
    %v442 = vunpack.c.l.b16 %v179
    %v443 = vunpack.c.l.b16 %v180
    %v444 = vunpack.c.l.b16 %v181
    %v445 = vunpack.c.l.b16 %v182
    %v446 = vunpack.c.l.b16 %v183
    %v447 = vunpack.c.l.b16 %v184
    %v448 = vunpack.c.l.b16 %v185
    %v449 = vunpack.c.l.b16 %v186
    %v450 = vunpack.c.l.b16 %v187
    %v451 = vunpack.c.l.b16 %v188
    %v452 = vunpack.c.l.b16 %v189
    %v453 = vunpack.c.l.b16 %v190
    %v454 = vunpack.c.l.b16 %v191
    %v455 = vunpack.c.l.b16 %v192
    %v456 = vunpack.c.l.b16 %v193
    %v457 = vunpack.c.l.b16 %v194
    %v458 = vunpack.c.l.b16 %v195
    %v459 = vunpack.c.l.b16 %v196
    %v460 = vunpack.c.l.b16 %v197
    %v461 = vunpack.c.l.b16 %v198
    %v462 = vunpack.c.l.b16 %v199
    %v463 = vunpack.c.l.b16 %v200
    %v464 = vunpack.c.l.b16 %v201
    %v465 = vunpack.c.l.b16 %v202
    %v466 = vunpack.c.l.b16 %v203
    %v467 = vunpack.c.l.b16 %v204
    %v468 = vunpack.c.l.b16 %v205
    %v469 = vunpack.c.l.b16 %v206
    %v470 = vunpack.c.l.b16 %v207
    %v471 = vunpack.c.l.b16 %v208
    %v472 = vunpack.c.l.b16 %v209
    %v473 = vunpack.c.l.b16 %v210
    %v474 = vunpack.c.l.b16 %v211
    %v475 = vunpack.c.l.b16 %v212
    %v476 = vunpack.c.l.b16 %v213
    %v477 = vunpack.c.l.b16 %v214
    %v478 = vunpack.c.l.b16 %v215
    %v479 = vunpack.c.l.b16 %v216
    %v480 = vunpack.c.l.b16 %v217
    %v481 = vunpack.c.l.b16 %v218
    %v482 = vunpack.c.l.b16 %v219
    %v483 = vunpack.c.l.b16 %v220
    %v484 = vunpack.c.l.b16 %v221
    %v485 = vunpack.c.l.b16 %v222
    %v486 = vunpack.c.l.b16 %v223
    %v487 = vunpack.c.l.b16 %v224
    %v488 = vunpack.c.l.b16 %v225
    %v489 = vunpack.c.l.b16 %v226
    %v490 = vunpack.c.l.b16 %v227
    %v491 = vunpack.c.l.b16 %v228
    %v492 = vunpack.c.l.b16 %v229
    %v493 = vunpack.c.l.b16 %v230
    %v494 = vunpack.c.l.b16 %v231
    %v495 = vunpack.c.l.b16 %v232
    %v496 = vunpack.c.l.b16 %v233
    %v497 = vunpack.c.l.b16 %v234
    %v498 = vunpack.c.l.b16 %v235
    %v499 = vunpack.c.l.b16 %v236
    %v500 = vunpack.c.l.b16 %v237
    %v501 = vunpack.c.l.b16 %v238
    %v502 = vunpack.c.l.b16 %v239
    %v503 = vunpack.c.l.b16 %v240
    %v504 = vunpack.c.l.b16 %v241
    %v505 = vunpack.c.l.b16 %v242
    %v506 = vunpack.c.l.b16 %v243
    %v507 = vunpack.c.l.b16 %v244
    %v508 = vunpack.c.l.b16 %v245
    %v509 = vunpack.c.l.b16 %v246
    %v510 = vunpack.c.l.b16 %v247
    %v511 = vunpack.c.l.b16 %v248
    %v512 = vunpack.c.l.b16 %v249
    %v513 = vunpack.c.l.b16 %v250
    %v514 = vunpack.c.l.b16 %v251
    %v515 = vunpack.c.l.b16 %v252
    %v516 = vunpack.c.l.b16 %v253
    %v517 = vunpack.c.l.b16 %v254
    %v518 = vunpack.c.l.b16 %v255
    %v519 = vunpack.c.l.b16 %v256
    %v520 = vunpack.c.l.b16 %v257
    %v521 = vunpack.c.l.b16 %v258
    %v522 = vunpack.c.l.b16 %v259
    %v523 = vunpack.c.l.b16 %v260
    %v524 = vunpack.c.l.b16 %v261
    %v525 = vunpack.c.l.b16 %v262
    %v526 = vunpack.c.l.b16 %v263
    %v527 = vunpack.c.l.b16 %v264
    %v528 = vunpack.c.l.b16 %v265
    %v529 = vunpack.c.l.b16 %v266
    %v530 = vunpack.c.l.b16 %v267
    %v531 = vunpack.c.l.b16 %v268
    %v532 = vunpack.c.l.b16 %v269
    %v533 = vunpack.c.l.b16 %v270
    %v534 = vunpack.c.l.b16 %v271
    %v535 = vunpack.c.l.b16 %v272
    %v536 = vunpack.c.l.b16 %v273
    %v537 = vunpack.c.l.b16 %v274
    %v538 = vunpack.c.l.b16 %v275
    %v539 = vunpack.c.l.b16 %v276
    %v540 = vunpack.c.l.b16 %v277
    %v541 = vunpack.c.l.b16 %v278
    %v542 = vunpack.c.l.b16 %v279
    %v543 = vunpack.c.l.b16 %v280
    %v544 = vunpack.c.l.b16 %v281
    %v545 = vunpack.c.l.b16 %v282
    %v546 = vunpack.c.l.b16 %v283
    %v547 = vunpack.c.l.b16 %v284
    %v548 = vunpack.c.l.b16 %v285
    %v549 = vunpack.c.l.b16 %v286
    %v550 = vunpack.c.l.b16 %v287
    %v551 = vunpack.c.l.b16 %v288
    %v552 = vunpack.c.l.b16 %v289
    %v553 = vunpack.c.l.b16 %v290
    %v554 = vunpack.c.l.b16 %v291
    %v555 = vpack.c.b16 %v428, %v427
    %v556 = vpack.c.b16 %v430, %v429
    %v557 = vpack.c.b16 %v432, %v431
    %v558 = vpack.c.b16 %v434, %v433
    %v559 = vpack.c.b16 %v436, %v435
    %v560 = vpack.c.b16 %v438, %v437
    %v561 = vpack.c.b16 %v440, %v439
    %v562 = vpack.c.b16 %v442, %v441
    %v563 = vpack.c.b16 %v444, %v443
    %v564 = vpack.c.b16 %v446, %v445
    %v565 = vpack.c.b16 %v448, %v447
    %v566 = vpack.c.b16 %v450, %v449
    %v567 = vpack.c.b16 %v452, %v451
    %v568 = vpack.c.b16 %v454, %v453
    %v569 = vpack.c.b16 %v456, %v455
    %v570 = vpack.c.b16 %v458, %v457
    %v571 = vpack.c.b16 %v460, %v459
    %v572 = vpack.c.b16 %v462, %v461
    %v573 = vpack.c.b16 %v464, %v463
    %v574 = vpack.c.b16 %v466, %v465
    %v575 = vpack.c.b16 %v468, %v467
    %v576 = vpack.c.b16 %v470, %v469
    %v577 = vpack.c.b16 %v472, %v471
    %v578 = vpack.c.b16 %v474, %v473
    %v579 = vpack.c.b16 %v476, %v475
    %v580 = vpack.c.b16 %v478, %v477
    %v581 = vpack.c.b16 %v480, %v479
    %v582 = vpack.c.b16 %v482, %v481
    %v583 = vpack.c.b16 %v484, %v483
    %v584 = vpack.c.b16 %v486, %v485
    %v585 = vpack.c.b16 %v488, %v487
    %v586 = vpack.c.b16 %v490, %v489
    %v587 = vpack.c.b16 %v492, %v491
    %v588 = vpack.c.b16 %v494, %v493
    %v589 = vpack.c.b16 %v496, %v495
    %v590 = vpack.c.b16 %v498, %v497
    %v591 = vpack.c.b16 %v500, %v499
    %v592 = vpack.c.b16 %v502, %v501
    %v593 = vpack.c.b16 %v504, %v503
    %v594 = vpack.c.b16 %v506, %v505
    %v595 = vpack.c.b16 %v508, %v507
    %v596 = vpack.c.b16 %v510, %v509
    %v597 = vpack.c.b16 %v512, %v511
    %v598 = vpack.c.b16 %v514, %v513
    %v599 = vpack.c.b16 %v516, %v515
    %v600 = vpack.c.b16 %v518, %v517
    %v601 = vpack.c.b16 %v520, %v519
    %v602 = vpack.c.b16 %v522, %v521
    %v603 = vpack.c.b16 %v524, %v523
    %v604 = vpack.c.b16 %v526, %v525
    %v605 = vpack.c.b16 %v528, %v527
    %v606 = vpack.c.b16 %v530, %v529
    %v607 = vpack.c.b16 %v532, %v531
    %v608 = vpack.c.b16 %v534, %v533
    %v609 = vpack.c.b16 %v536, %v535
    %v610 = vpack.c.b16 %v538, %v537
    %v611 = vpack.c.b16 %v540, %v539
    %v612 = vpack.c.b16 %v542, %v541
    %v613 = vpack.c.b16 %v544, %v543
    %v614 = vpack.c.b16 %v546, %v545
    %v615 = vpack.c.b16 %v548, %v547
    %v616 = vpack.c.b16 %v550, %v549
    %v617 = vpack.c.b16 %v552, %v551
    %v618 = vpack.c.b16 %v554, %v553
    %683 = vmatprep.subr.bf16.mxu0 0
    %684 = vmatpush1.bf16.msra.mxu0 %v555
    %685 = vmatprep.subr.bf16.mxu0 0
    %686 = vmatpush1.bf16.msra.mxu0 %v556
    %687 = vmatprep.subr.bf16.mxu0 0
    %688 = vmatpush1.bf16.msra.mxu0 %v557
    %689 = vmatprep.subr.bf16.mxu0 0
    %690 = vmatpush1.bf16.msra.mxu0 %v558
    %691 = vmatprep.subr.bf16.mxu0 0
    %692 = vmatpush1.bf16.msra.mxu0 %v559
    %693 = vmatprep.subr.bf16.mxu0 0
    %694 = vmatpush1.bf16.msra.mxu0 %v560
    %695 = vmatprep.subr.bf16.mxu0 0
    %696 = vmatpush1.bf16.msra.mxu0 %v561
    %697 = vmatprep.subr.bf16.mxu0 0
    %698 = vmatpush1.bf16.msra.mxu0 %v562
    %699 = vmatprep.subr.bf16.mxu0 0
    %700 = vmatpush1.bf16.msra.mxu0 %v563
    %701 = vmatprep.subr.bf16.mxu0 0
    %702 = vmatpush1.bf16.msra.mxu0 %v564
    %703 = vmatprep.subr.bf16.mxu0 0
    %704 = vmatpush1.bf16.msra.mxu0 %v565
    %705 = vmatprep.subr.bf16.mxu0 0
    %706 = vmatpush1.bf16.msra.mxu0 %v566
    %707 = vmatprep.subr.bf16.mxu0 0
    %708 = vmatpush1.bf16.msra.mxu0 %v567
    %709 = vmatprep.subr.bf16.mxu0 0
    %710 = vmatpush1.bf16.msra.mxu0 %v568
    %711 = vmatprep.subr.bf16.mxu0 0
    %712 = vmatpush1.bf16.msra.mxu0 %v569
    %713 = vmatprep.subr.bf16.mxu0 0
    %714 = vmatpush1.bf16.msra.mxu0 %v570
    %715 = vmatprep.mubr.bf16.mxu0 %v157
    %716 = vmatmul.mubr.bf16.gmra.mrb[0].mxu0 %v156
    %v717 = vpop.f32.mrb[0].mxu0
    %v718 = vadd.f32 %v297, %v717
    %v719 = vpop.f32.mrb[0].mxu0
    %v720 = vpop.f32.mrb[0].mxu0
    %v721 = vpop.f32.mrb[0].mxu0
    %722 = vdwg.mxu0
    %723 = vmatprep.subr.bf16.mxu0 0
    %724 = vmatpush1.bf16.msra.mxu0 %v571
    %725 = vmatprep.subr.bf16.mxu0 0
    %726 = vmatpush1.bf16.msra.mxu0 %v572
    %727 = vmatprep.subr.bf16.mxu0 0
    %728 = vmatpush1.bf16.msra.mxu0 %v573
    %729 = vmatprep.subr.bf16.mxu0 0
    %730 = vmatpush1.bf16.msra.mxu0 %v574
    %731 = vmatprep.subr.bf16.mxu0 0
    %732 = vmatpush1.bf16.msra.mxu0 %v575
    %733 = vmatprep.subr.bf16.mxu0 0
    %734 = vmatpush1.bf16.msra.mxu0 %v576
    %735 = vmatprep.subr.bf16.mxu0 0
    %736 = vmatpush1.bf16.msra.mxu0 %v577
    %737 = vmatprep.subr.bf16.mxu0 0
    %738 = vmatpush1.bf16.msra.mxu0 %v578
    %739 = vmatprep.subr.bf16.mxu0 0
    %740 = vmatpush1.bf16.msra.mxu0 %v579
    %741 = vmatprep.subr.bf16.mxu0 0
    %742 = vmatpush1.bf16.msra.mxu0 %v580
    %743 = vmatprep.subr.bf16.mxu0 0
    %744 = vmatpush1.bf16.msra.mxu0 %v581
    %745 = vmatprep.subr.bf16.mxu0 0
    %746 = vmatpush1.bf16.msra.mxu0 %v582
    %747 = vmatprep.subr.bf16.mxu0 0
    %748 = vmatpush1.bf16.msra.mxu0 %v583
    %749 = vmatprep.subr.bf16.mxu0 0
    %750 = vmatpush1.bf16.msra.mxu0 %v584
    %751 = vmatprep.subr.bf16.mxu0 0
    %752 = vmatpush1.bf16.msra.mxu0 %v585
    %753 = vmatprep.subr.bf16.mxu0 0
    %754 = vmatpush1.bf16.msra.mxu0 %v586
    %755 = vmatprep.mubr.bf16.mxu0 %v159
    %756 = vmatmul.mubr.bf16.gmra.mrb[0].mxu0 %v158
    %v757 = vpop.f32.mrb[0].mxu0
    %v758 = vadd.f32 %v718, %v757
    %v759 = vpop.f32.mrb[0].mxu0
    %v760 = vpop.f32.mrb[0].mxu0
    %v761 = vpop.f32.mrb[0].mxu0
    %762 = vdwg.mxu0
    %763 = vmatprep.subr.bf16.mxu0 0
    %764 = vmatpush1.bf16.msra.mxu0 %v587
    %765 = vmatprep.subr.bf16.mxu0 0
    %766 = vmatpush1.bf16.msra.mxu0 %v588
    %767 = vmatprep.subr.bf16.mxu0 0
    %768 = vmatpush1.bf16.msra.mxu0 %v589
    %769 = vmatprep.subr.bf16.mxu0 0
    %770 = vmatpush1.bf16.msra.mxu0 %v590
    %771 = vmatprep.subr.bf16.mxu0 0
    %772 = vmatpush1.bf16.msra.mxu0 %v591
    %773 = vmatprep.subr.bf16.mxu0 0
    %774 = vmatpush1.bf16.msra.mxu0 %v592
    %775 = vmatprep.subr.bf16.mxu0 0
    %776 = vmatpush1.bf16.msra.mxu0 %v593
    %777 = vmatprep.subr.bf16.mxu0 0
    %778 = vmatpush1.bf16.msra.mxu0 %v594
    %779 = vmatprep.subr.bf16.mxu0 0
    %780 = vmatpush1.bf16.msra.mxu0 %v595
    %781 = vmatprep.subr.bf16.mxu0 0
    %782 = vmatpush1.bf16.msra.mxu0 %v596
    %783 = vmatprep.subr.bf16.mxu0 0
    %784 = vmatpush1.bf16.msra.mxu0 %v597
    %785 = vmatprep.subr.bf16.mxu0 0
    %786 = vmatpush1.bf16.msra.mxu0 %v598
    %787 = vmatprep.subr.bf16.mxu0 0
    %788 = vmatpush1.bf16.msra.mxu0 %v599
    %789 = vmatprep.subr.bf16.mxu0 0
    %790 = vmatpush1.bf16.msra.mxu0 %v600
    %791 = vmatprep.subr.bf16.mxu0 0
    %792 = vmatpush1.bf16.msra.mxu0 %v601
    %793 = vmatprep.subr.bf16.mxu0 0
    %794 = vmatpush1.bf16.msra.mxu0 %v602
    %795 = vmatprep.mubr.bf16.mxu0 %v161
    %796 = vmatmul.mubr.bf16.gmra.mrb[0].mxu0 %v160
    %v797 = vpop.f32.mrb[0].mxu0
    %v798 = vadd.f32 %v758, %v797
    %v799 = vpop.f32.mrb[0].mxu0
    %v800 = vpop.f32.mrb[0].mxu0
    %v801 = vpop.f32.mrb[0].mxu0
    %802 = vdwg.mxu0
    %803 = vmatprep.subr.bf16.mxu0 0
    %804 = vmatpush1.bf16.msra.mxu0 %v603
    %805 = vmatprep.subr.bf16.mxu0 0
    %806 = vmatpush1.bf16.msra.mxu0 %v604
    %807 = vmatprep.subr.bf16.mxu0 0
    %808 = vmatpush1.bf16.msra.mxu0 %v605
    %809 = vmatprep.subr.bf16.mxu0 0
    %810 = vmatpush1.bf16.msra.mxu0 %v606
    %811 = vmatprep.subr.bf16.mxu0 0
    %812 = vmatpush1.bf16.msra.mxu0 %v607
    %813 = vmatprep.subr.bf16.mxu0 0
    %814 = vmatpush1.bf16.msra.mxu0 %v608
    %815 = vmatprep.subr.bf16.mxu0 0
    %816 = vmatpush1.bf16.msra.mxu0 %v609
    %817 = vmatprep.subr.bf16.mxu0 0
    %818 = vmatpush1.bf16.msra.mxu0 %v610
    %819 = vmatprep.subr.bf16.mxu0 0
    %820 = vmatpush1.bf16.msra.mxu0 %v611
    %821 = vmatprep.subr.bf16.mxu0 0
    %822 = vmatpush1.bf16.msra.mxu0 %v612
    %823 = vmatprep.subr.bf16.mxu0 0
    %824 = vmatpush1.bf16.msra.mxu0 %v613
    %825 = vmatprep.subr.bf16.mxu0 0
    %826 = vmatpush1.bf16.msra.mxu0 %v614
    %827 = vmatprep.subr.bf16.mxu0 0
    %828 = vmatpush1.bf16.msra.mxu0 %v615
    %829 = vmatprep.subr.bf16.mxu0 0
    %830 = vmatpush1.bf16.msra.mxu0 %v616
    %831 = vmatprep.subr.bf16.mxu0 0
    %832 = vmatpush1.bf16.msra.mxu0 %v617
    %833 = vmatprep.subr.bf16.mxu0 0
    %834 = vmatpush1.bf16.msra.mxu0 %v618
    %835 = vmatprep.mubr.bf16.mxu0 %v163
    %836 = vmatmul.mubr.bf16.gmra.mrb[0].mxu0 %v162
    %v837 = vpop.f32.mrb[0].mxu0
    %v838 = vadd.f32 %v798, %v837
    %v839 = vpop.f32.mrb[0].mxu0
    %v840 = vpop.f32.mrb[0].mxu0
    %v841 = vpop.f32.mrb[0].mxu0
    %842 = vdwg.mxu0
    %v843 = vmax.f32 %v838, 0.0
    %v844 = vpack.c.bf16 %v843, %v843
    %v845 = vld [vmem:[#allocation7] sm:$0xf]
    %v846 = vld [vmem:[#allocation7 + $0x4] sm:$0xf]
    %v847 = vld [vmem:[#allocation7 + $0x8] sm:$0xf]
    %v848 = vld [vmem:[#allocation7 + $0xc] sm:$0xf]
    %v849 = vld [vmem:[#allocation7 + $0x10] sm:$0xf]
    %v850 = vld [vmem:[#allocation7 + $0x14] sm:$0xf]
    %v851 = vld [vmem:[#allocation7 + $0x18] sm:$0xf]
    %v852 = vld [vmem:[#allocation7 + $0x1c] sm:$0xf]
    %v853 = vld [vmem:[#allocation7 + $0x20] sm:$0xf]
    %v854 = vld [vmem:[#allocation7 + $0x24] sm:$0xf]
    %v855 = vld [vmem:[#allocation7 + $0x28] sm:$0xf]
    %v856 = vld [vmem:[#allocation7 + $0x2c] sm:$0xf]
    %v857 = vld [vmem:[#allocation7 + $0x30] sm:$0xf]
    %v858 = vld [vmem:[#allocation7 + $0x34] sm:$0xf]
    %v859 = vld [vmem:[#allocation7 + $0x38] sm:$0xf]
    %v860 = vld [vmem:[#allocation7 + $0x3c] sm:$0xf]
    %v861 = vld [vmem:[%s6] sm:$0x1]
    %v863 = vlaneseq
    %v864 = vshrl.u32 %v863, 7
    %v865 = vsub.s32 0, %v864
    %v866 = vrot.slane %v861, %v865
    %v884 = vunpack.c.l.b16 %v845
    %v885 = vunpack.c.l.b16 %v846
    %v886 = vunpack.c.l.b16 %v847
    %v887 = vunpack.c.l.b16 %v848
    %v888 = vunpack.c.l.b16 %v849
    %v889 = vunpack.c.l.b16 %v850
    %v890 = vunpack.c.l.b16 %v851
    %v891 = vunpack.c.l.b16 %v852
    %v892 = vunpack.c.l.b16 %v853
    %v893 = vunpack.c.l.b16 %v854
    %v894 = vunpack.c.l.b16 %v855
    %v895 = vunpack.c.l.b16 %v856
    %v896 = vunpack.c.l.b16 %v857
    %v897 = vunpack.c.l.b16 %v858
    %v898 = vunpack.c.l.b16 %v859
    %v899 = vunpack.c.l.b16 %v860
    %v900 = vpack.c.b16 %v885, %v884
    %v901 = vpack.c.b16 %v887, %v886
    %v902 = vpack.c.b16 %v889, %v888
    %v903 = vpack.c.b16 %v891, %v890
    %v904 = vpack.c.b16 %v893, %v892
    %v905 = vpack.c.b16 %v895, %v894
    %v906 = vpack.c.b16 %v897, %v896
    %v907 = vpack.c.b16 %v899, %v898
    %916 = vmatprep.subr.bf16.mxu0 0
    %917 = vmatpush1.bf16.msra.mxu0 %v900
    %918 = vmatprep.subr.bf16.mxu0 0
    %919 = vmatpush1.bf16.msra.mxu0 %v901
    %920 = vmatprep.subr.bf16.mxu0 0
    %921 = vmatpush1.bf16.msra.mxu0 %v902
    %922 = vmatprep.subr.bf16.mxu0 0
    %923 = vmatpush1.bf16.msra.mxu0 %v903
    %924 = vmatprep.subr.bf16.mxu0 0
    %925 = vmatpush1.bf16.msra.mxu0 %v904
    %926 = vmatprep.subr.bf16.mxu0 0
    %927 = vmatpush1.bf16.msra.mxu0 %v905
    %928 = vmatprep.subr.bf16.mxu0 0
    %929 = vmatpush1.bf16.msra.mxu0 %v906
    %930 = vmatprep.subr.bf16.mxu0 0
    %931 = vmatpush1.bf16.msra.mxu0 %v907
    %932 = vmatprep.subr.bf16.mxu0 0
    %933 = vmatpush1.bf16.msra.mxu0 0
    %934 = vmatprep.subr.bf16.mxu0 0
    %935 = vmatpush1.bf16.msra.mxu0 0
    %936 = vmatprep.subr.bf16.mxu0 0
    %937 = vmatpush1.bf16.msra.mxu0 0
    %938 = vmatprep.subr.bf16.mxu0 0
    %939 = vmatpush1.bf16.msra.mxu0 0
    %940 = vmatprep.subr.bf16.mxu0 0
    %941 = vmatpush1.bf16.msra.mxu0 0
    %942 = vmatprep.subr.bf16.mxu0 0
    %943 = vmatpush1.bf16.msra.mxu0 0
    %944 = vmatprep.subr.bf16.mxu0 0
    %945 = vmatpush1.bf16.msra.mxu0 0
    %946 = vmatprep.subr.bf16.mxu0 0
    %947 = vmatpush1.bf16.msra.mxu0 0
    %948 = vmatprep.mubr.bf16.mxu0 0
    %949 = vmatmul.mubr.bf16.gmra.mrb[0].mxu0 %v844
    %v950 = vpop.f32.mrb[0].mxu0
    %v951 = vadd.f32 %v866, %v950
    %v952 = vpop.f32.mrb[0].mxu0
    %v953 = vpop.f32.mrb[0].mxu0
    %v954 = vpop.f32.mrb[0].mxu0
    %955 = vdwg.mxu0
    %956 = vst [vmem:[#allocation11] sm:$0x3] %v951
    %v957 = vld [vmem:[#allocation8] sm:$0xf]
    %v958 = vld [vmem:[#allocation8 + $0x4] sm:$0xf]
    %v959 = vld [vmem:[#allocation8 + $0x8] sm:$0xf]
    %v960 = vld [vmem:[#allocation8 + $0xc] sm:$0xf]
    %v961 = vld [vmem:[#allocation8 + $0x10] sm:$0xf]
    %v962 = vld [vmem:[#allocation8 + $0x14] sm:$0xf]
    %v963 = vld [vmem:[#allocation8 + $0x18] sm:$0xf]
    %v964 = vld [vmem:[#allocation8 + $0x1c] sm:$0xf]
    %v965 = vld [vmem:[%s8] sm:$0x1]
    %v966 = vld [vmem:[#allocation10] sm:$0xf]
    %v967 = vld [vmem:[#allocation10 + $0x4] sm:$0xf]
    %v968 = vld [vmem:[#allocation10 + $0x8] sm:$0xf]
    %v969 = vld [vmem:[#allocation10 + $0xc] sm:$0xf]
    %v970 = vld [vmem:[#allocation10 + $0x10] sm:$0xf]
    %v971 = vld [vmem:[#allocation10 + $0x14] sm:$0xf]
    %v972 = vld [vmem:[#allocation10 + $0x18] sm:$0xf]
    %v973 = vld [vmem:[#allocation10 + $0x1c] sm:$0xf]
    %v974 = vld [vmem:[#allocation10 + $0x20] sm:$0xf]
    %v975 = vld [vmem:[#allocation10 + $0x24] sm:$0xf]
    %v976 = vld [vmem:[#allocation10 + $0x28] sm:$0xf]
    %v977 = vld [vmem:[#allocation10 + $0x2c] sm:$0xf]
    %v978 = vld [vmem:[#allocation10 + $0x30] sm:$0xf]
    %v979 = vld [vmem:[#allocation10 + $0x34] sm:$0xf]
    %v980 = vld [vmem:[#allocation10 + $0x38] sm:$0xf]
    %v981 = vld [vmem:[#allocation10 + $0x3c] sm:$0xf]
    %v982 = vld [vmem:[%s10] sm:$0x1]
    %v983 = vld [vmem:[%s1] sm:$0x3]
    %v984 = vpack.c.bf16 %v983, %v983
    %v986 = vlaneseq
    %v987 = vshrl.u32 %v986, 7
    %v988 = vsub.s32 0, %v987
    %v989 = vrot.slane %v965, %v988
    %v999 = vunpack.c.l.b16 %v957
    %v1000 = vunpack.c.l.b16 %v958
    %v1001 = vunpack.c.l.b16 %v959
    %v1002 = vunpack.c.l.b16 %v960
    %v1003 = vunpack.c.l.b16 %v961
    %v1004 = vunpack.c.l.b16 %v962
    %v1005 = vunpack.c.l.b16 %v963
    %v1006 = vunpack.c.l.b16 %v964
    %v1007 = vpack.c.b16 %v1000, %v999
    %v1008 = vpack.c.b16 %v1002, %v1001
    %v1009 = vpack.c.b16 %v1004, %v1003
    %v1010 = vpack.c.b16 %v1006, %v1005
    %vm1015 = vcmask 523264
    %v1017 = vsel %vm1015, %v984, 0
    %1019 = vmatprep.subr.bf16.mxu0 0
    %1020 = vmatpush1.bf16.msra.mxu0 %v1007
    %1021 = vmatprep.subr.bf16.mxu0 0
    %1022 = vmatpush1.bf16.msra.mxu0 %v1008
    %1023 = vmatprep.subr.bf16.mxu0 0
    %1024 = vmatpush1.bf16.msra.mxu0 %v1009
    %1025 = vmatprep.subr.bf16.mxu0 0
    %1026 = vmatpush1.bf16.msra.mxu0 %v1010
    %1027 = vmatprep.subr.bf16.mxu0 0
    %1028 = vmatpush1.bf16.msra.mxu0 0
    %1029 = vmatprep.subr.bf16.mxu0 0
    %1030 = vmatpush1.bf16.msra.mxu0 0
    %1031 = vmatprep.subr.bf16.mxu0 0
    %1032 = vmatpush1.bf16.msra.mxu0 0
    %1033 = vmatprep.subr.bf16.mxu0 0
    %1034 = vmatpush1.bf16.msra.mxu0 0
    %1035 = vmatprep.subr.bf16.mxu0 0
    %1036 = vmatpush1.bf16.msra.mxu0 0
    %1037 = vmatprep.subr.bf16.mxu0 0
    %1038 = vmatpush1.bf16.msra.mxu0 0
    %1039 = vmatprep.subr.bf16.mxu0 0
    %1040 = vmatpush1.bf16.msra.mxu0 0
    %1041 = vmatprep.subr.bf16.mxu0 0
    %1042 = vmatpush1.bf16.msra.mxu0 0
    %1043 = vmatprep.subr.bf16.mxu0 0
    %1044 = vmatpush1.bf16.msra.mxu0 0
    %1045 = vmatprep.subr.bf16.mxu0 0
    %1046 = vmatpush1.bf16.msra.mxu0 0
    %1047 = vmatprep.subr.bf16.mxu0 0
    %1048 = vmatpush1.bf16.msra.mxu0 0
    %1049 = vmatprep.subr.bf16.mxu0 0
    %1050 = vmatpush1.bf16.msra.mxu0 0
    %1051 = vmatprep.mubr.bf16.mxu0 0
    %1052 = vmatmul.mubr.bf16.gmra.mrb[0].mxu0 %v1017
    %v1053 = vpop.f32.mrb[0].mxu0
    %v1054 = vadd.f32 %v989, %v1053
    %v1055 = vpop.f32.mrb[0].mxu0
    %v1056 = vpop.f32.mrb[0].mxu0
    %v1057 = vpop.f32.mrb[0].mxu0
    %1058 = vdwg.mxu0
    %v1059 = vmax.f32 %v1054, 0.0
    %v1060 = vpack.c.bf16 %v1059, %v1059
    %v1062 = vlaneseq
    %v1063 = vshrl.u32 %v1062, 7
    %v1064 = vsub.s32 0, %v1063
    %v1065 = vrot.slane %v982, %v1064
    %v1083 = vunpack.c.l.b16 %v966
    %v1084 = vunpack.c.l.b16 %v967
    %v1085 = vunpack.c.l.b16 %v968
    %v1086 = vunpack.c.l.b16 %v969
    %v1087 = vunpack.c.l.b16 %v970
    %v1088 = vunpack.c.l.b16 %v971
    %v1089 = vunpack.c.l.b16 %v972
    %v1090 = vunpack.c.l.b16 %v973
    %v1091 = vunpack.c.l.b16 %v974
    %v1092 = vunpack.c.l.b16 %v975
    %v1093 = vunpack.c.l.b16 %v976
    %v1094 = vunpack.c.l.b16 %v977
    %v1095 = vunpack.c.l.b16 %v978
    %v1096 = vunpack.c.l.b16 %v979
    %v1097 = vunpack.c.l.b16 %v980
    %v1098 = vunpack.c.l.b16 %v981
    %v1099 = vpack.c.b16 %v1084, %v1083
    %v1100 = vpack.c.b16 %v1086, %v1085
    %v1101 = vpack.c.b16 %v1088, %v1087
    %v1102 = vpack.c.b16 %v1090, %v1089
    %v1103 = vpack.c.b16 %v1092, %v1091
    %v1104 = vpack.c.b16 %v1094, %v1093
    %v1105 = vpack.c.b16 %v1096, %v1095
    %v1106 = vpack.c.b16 %v1098, %v1097
    %1115 = vmatprep.subr.bf16.mxu0 0
    %1116 = vmatpush1.bf16.msra.mxu0 %v1099
    %1117 = vmatprep.subr.bf16.mxu0 0
    %1118 = vmatpush1.bf16.msra.mxu0 %v1100
    %1119 = vmatprep.subr.bf16.mxu0 0
    %1120 = vmatpush1.bf16.msra.mxu0 %v1101
    %1121 = vmatprep.subr.bf16.mxu0 0
    %1122 = vmatpush1.bf16.msra.mxu0 %v1102
    %1123 = vmatprep.subr.bf16.mxu0 0
    %1124 = vmatpush1.bf16.msra.mxu0 %v1103
    %1125 = vmatprep.subr.bf16.mxu0 0
    %1126 = vmatpush1.bf16.msra.mxu0 %v1104
    %1127 = vmatprep.subr.bf16.mxu0 0
    %1128 = vmatpush1.bf16.msra.mxu0 %v1105
    %1129 = vmatprep.subr.bf16.mxu0 0
    %1130 = vmatpush1.bf16.msra.mxu0 %v1106
    %1131 = vmatprep.subr.bf16.mxu0 0
    %1132 = vmatpush1.bf16.msra.mxu0 0
    %1133 = vmatprep.subr.bf16.mxu0 0
    %1134 = vmatpush1.bf16.msra.mxu0 0
    %1135 = vmatprep.subr.bf16.mxu0 0
    %1136 = vmatpush1.bf16.msra.mxu0 0
    %1137 = vmatprep.subr.bf16.mxu0 0
    %1138 = vmatpush1.bf16.msra.mxu0 0
    %1139 = vmatprep.subr.bf16.mxu0 0
    %1140 = vmatpush1.bf16.msra.mxu0 0
    %1141 = vmatprep.subr.bf16.mxu0 0
    %1142 = vmatpush1.bf16.msra.mxu0 0
    %1143 = vmatprep.subr.bf16.mxu0 0
    %1144 = vmatpush1.bf16.msra.mxu0 0
    %1145 = vmatprep.subr.bf16.mxu0 0
    %1146 = vmatpush1.bf16.msra.mxu0 0
    %1147 = vmatprep.mubr.bf16.mxu0 0
    %1148 = vmatmul.mubr.bf16.gmra.mrb[0].mxu0 %v1060
    %v1149 = vpop.f32.mrb[0].mxu0
    %v1150 = vadd.f32 %v1065, %v1149
    %v1151 = vpop.f32.mrb[0].mxu0
    %v1152 = vpop.f32.mrb[0].mxu0
    %v1153 = vpop.f32.mrb[0].mxu0
    %1154 = vdwg.mxu0
    %1155 = vst [vmem:[#allocation12] sm:$0x3] %v1150
    %v1156 = vld [vmem:[%s2] sm:$0x3]
    %v1157 = vpack.c.bf16 %v1156, %v1156
    %v1159 = vsel %vm1015, %v1157, 0
    %1161 = vmatprep.subr.bf16.mxu0 0
    %1162 = vmatpush1.bf16.msra.mxu0 %v1007
    %1163 = vmatprep.subr.bf16.mxu0 0
    %1164 = vmatpush1.bf16.msra.mxu0 %v1008
    %1165 = vmatprep.subr.bf16.mxu0 0
    %1166 = vmatpush1.bf16.msra.mxu0 %v1009
    %1167 = vmatprep.subr.bf16.mxu0 0
    %1168 = vmatpush1.bf16.msra.mxu0 %v1010
    %1169 = vmatprep.subr.bf16.mxu0 0
    %1170 = vmatpush1.bf16.msra.mxu0 0
    %1171 = vmatprep.subr.bf16.mxu0 0
    %1172 = vmatpush1.bf16.msra.mxu0 0
    %1173 = vmatprep.subr.bf16.mxu0 0
    %1174 = vmatpush1.bf16.msra.mxu0 0
    %1175 = vmatprep.subr.bf16.mxu0 0
    %1176 = vmatpush1.bf16.msra.mxu0 0
    %1177 = vmatprep.subr.bf16.mxu0 0
    %1178 = vmatpush1.bf16.msra.mxu0 0
    %1179 = vmatprep.subr.bf16.mxu0 0
    %1180 = vmatpush1.bf16.msra.mxu0 0
    %1181 = vmatprep.subr.bf16.mxu0 0
    %1182 = vmatpush1.bf16.msra.mxu0 0
    %1183 = vmatprep.subr.bf16.mxu0 0
    %1184 = vmatpush1.bf16.msra.mxu0 0
    %1185 = vmatprep.subr.bf16.mxu0 0
    %1186 = vmatpush1.bf16.msra.mxu0 0
    %1187 = vmatprep.subr.bf16.mxu0 0
    %1188 = vmatpush1.bf16.msra.mxu0 0
    %1189 = vmatprep.subr.bf16.mxu0 0
    %1190 = vmatpush1.bf16.msra.mxu0 0
    %1191 = vmatprep.subr.bf16.mxu0 0
    %1192 = vmatpush1.bf16.msra.mxu0 0
    %1193 = vmatprep.mubr.bf16.mxu0 0
    %1194 = vmatmul.mubr.bf16.gmra.mrb[0].mxu0 %v1159
    %v1195 = vpop.f32.mrb[0].mxu0
    %v1196 = vadd.f32 %v989, %v1195
    %v1197 = vpop.f32.mrb[0].mxu0
    %v1198 = vpop.f32.mrb[0].mxu0
    %v1199 = vpop.f32.mrb[0].mxu0
    %1200 = vdwg.mxu0
    %v1201 = vmax.f32 %v1196, 0.0
    %v1202 = vpack.c.bf16 %v1201, %v1201
    %1203 = vmatprep.subr.bf16.mxu0 0
    %1204 = vmatpush1.bf16.msra.mxu0 %v1099
    %1205 = vmatprep.subr.bf16.mxu0 0
    %1206 = vmatpush1.bf16.msra.mxu0 %v1100
    %1207 = vmatprep.subr.bf16.mxu0 0
    %1208 = vmatpush1.bf16.msra.mxu0 %v1101
    %1209 = vmatprep.subr.bf16.mxu0 0
    %1210 = vmatpush1.bf16.msra.mxu0 %v1102
    %1211 = vmatprep.subr.bf16.mxu0 0
    %1212 = vmatpush1.bf16.msra.mxu0 %v1103
    %1213 = vmatprep.subr.bf16.mxu0 0
    %1214 = vmatpush1.bf16.msra.mxu0 %v1104
    %1215 = vmatprep.subr.bf16.mxu0 0
    %1216 = vmatpush1.bf16.msra.mxu0 %v1105
    %1217 = vmatprep.subr.bf16.mxu0 0
    %1218 = vmatpush1.bf16.msra.mxu0 %v1106
    %1219 = vmatprep.subr.bf16.mxu0 0
    %1220 = vmatpush1.bf16.msra.mxu0 0
    %1221 = vmatprep.subr.bf16.mxu0 0
    %1222 = vmatpush1.bf16.msra.mxu0 0
    %1223 = vmatprep.subr.bf16.mxu0 0
    %1224 = vmatpush1.bf16.msra.mxu0 0
    %1225 = vmatprep.subr.bf16.mxu0 0
    %1226 = vmatpush1.bf16.msra.mxu0 0
    %1227 = vmatprep.subr.bf16.mxu0 0
    %1228 = vmatpush1.bf16.msra.mxu0 0
    %1229 = vmatprep.subr.bf16.mxu0 0
    %1230 = vmatpush1.bf16.msra.mxu0 0
    %1231 = vmatprep.subr.bf16.mxu0 0
    %1232 = vmatpush1.bf16.msra.mxu0 0
    %1233 = vmatprep.subr.bf16.mxu0 0
    %1234 = vmatpush1.bf16.msra.mxu0 0
    %1235 = vmatprep.mubr.bf16.mxu0 0
    %1236 = vmatmul.mubr.bf16.gmra.mrb[0].mxu0 %v1202
    %v1237 = vpop.f32.mrb[0].mxu0
    %v1238 = vadd.f32 %v1065, %v1237
    %v1239 = vpop.f32.mrb[0].mxu0
    %v1240 = vpop.f32.mrb[0].mxu0
    %v1241 = vpop.f32.mrb[0].mxu0
    %1242 = vdwg.mxu0
    %1243 = vst [vmem:[#allocation14] sm:$0x3] %v1238
    // Predicated region
    $region66: #{tpu_custom_call.1} parent=1 // pred_check
      _
    $region67: #{tpu_custom_call.1} parent=1 // pred_check_branch
      %1245 = sbr.rel (0) target = $region69
    $region68: #{tpu_custom_call.1} parent=1 // pred_region
      %s1247 = ssub.s32 32, 32
      %1248 = vsyncadd [#allocation4], %s1247
      %s1250 = sshll.u32 [#allocation11], 4
      %s1251 = int_to_ptr.vmem [resolvable:$true] %s1250
      %1253 = dma.vmem_to_hbm [thread:$0]  %s1251, 32, %s11, [#allocation4]
    $region69: #{tpu_custom_call.1} parent=1 // pred_fallthru
      _
    // Predicated region
    $region70: #{tpu_custom_call.1} parent=1 // pred_check
      _
    $region71: #{tpu_custom_call.1} parent=1 // pred_check_branch
      %1255 = sbr.rel (0) target = $region73
    $region72: #{tpu_custom_call.1} parent=1 // pred_region
      %s1257 = ssub.s32 32, 32
      %1258 = vsyncadd [#allocation13], %s1257
      %s1260 = sshll.u32 [#allocation12], 4
      %s1261 = int_to_ptr.vmem [resolvable:$true] %s1260
      %1263 = dma.vmem_to_hbm [thread:$0]  %s1261, 32, %s12, [#allocation13]
    $region73: #{tpu_custom_call.1} parent=1 // pred_fallthru
      _
    // Predicated region
    $region74: #{tpu_custom_call.1} parent=1 // pred_check
      _
    $region75: #{tpu_custom_call.1} parent=1 // pred_check_branch
      %1265 = sbr.rel (0) target = $region77
    $region76: #{tpu_custom_call.1} parent=1 // pred_region
      %s1267 = ssub.s32 32, 32
      %1268 = vsyncadd [#allocation13], %s1267
      %s1270 = sshll.u32 [#allocation14], 4
      %s1271 = int_to_ptr.vmem [resolvable:$true] %s1270
      %1273 = dma.vmem_to_hbm [thread:$0]  %s1271, 32, %s13, [#allocation13]
    $region77: #{tpu_custom_call.1} parent=1 // pred_fallthru
      _
    // Predicated region
    $region78: #{tpu_custom_call.1} parent=1 // pred_check
      _
    $region79: #{tpu_custom_call.1} parent=1 // pred_check_branch
      %1275 = sbr.rel (0) target = $region81
    $region80: #{tpu_custom_call.1} parent=1 // pred_region
      %1276 = dma.done [#allocation4], 32
    $region81: #{tpu_custom_call.1} parent=1 // pred_fallthru
      _
    // Predicated region
    $region82: #{tpu_custom_call.1} parent=1 // pred_check
      _
    $region83: #{tpu_custom_call.1} parent=1 // pred_check_branch
      %1278 = sbr.rel (0) target = $region85
    $region84: #{tpu_custom_call.1} parent=1 // pred_region
      %1279 = dma.done [#allocation13], 32
    $region85: #{tpu_custom_call.1} parent=1 // pred_fallthru
      _
    // Predicated region
    $region86: #{tpu_custom_call.1} parent=1 // pred_check
      _
    $region87: #{tpu_custom_call.1} parent=1 // pred_check_branch
      %1281 = sbr.rel (0) target = $region89
    $region88: #{tpu_custom_call.1} parent=1 // pred_region
      %1282 = dma.done [#allocation13], 32
    $region89: #{tpu_custom_call.1} parent=1 // pred_fallthru
      _
    %1283 = vsyncpa [#allocation3], 1
    %1284 = vsyncpa [#allocation6], 1
    %1285 = vsyncpa [#allocation9], 1
    %1286 = vsyncpa [#allocation4], 1
    %1287 = vsyncpa [#allocation13], 1

</llo_original>
